<compile_context>
chip_gen: v7x
topology: tpu7x:2x2x1
jax: 0.10.0
libtpu: 0.0.40
codegen_flags: <defaults>
</compile_context>

<pallas_src>
import functools
import math

import jax
import jax.numpy as jnp
from jax import lax
from jax.experimental import pallas as pl
from jax.experimental.pallas import tpu as pltpu


# ----------------------------------------------------------------------------
# Kernel 1: embedding / conditioning path
#   cond = f0_embed(log(1+f0/700)) + spk_embed(spk_id)     (emitted in bf16)
#   x    = unit_embed(units) + volume_embed(volume) + noise
# ----------------------------------------------------------------------------
def _embed_kernel(f0_ref, vol_ref, units_ref, spk_ref, noise_ref,
                  wf0_ref, bf0_ref, wu_ref, bu_ref, wv_ref, bv_ref,
                  cond_ref, x_ref):
    f0 = f0_ref[0]         # [T, 1]  f32
    vol = vol_ref[0]       # [T, 1]  f32
    units = units_ref[0]   # [T, n_unit]  bf16 (cast hoisted to the wrapper)
    spk = spk_ref[0]       # [1, H]  f32
    noise = noise_ref[0]   # [T, M]  f32

    f0_feat = jnp.log(1.0 + f0 / 700.0)                        # [T, 1]
    cond = f0_feat * wf0_ref[...] + bf0_ref[...] + spk         # [T, H] f32

    x = (jnp.dot(units, wu_ref[...], preferred_element_type=jnp.float32)
         + bu_ref[...]
         + vol * wv_ref[...] + bv_ref[...]
         + noise)                                              # [T, M] f32

    cond_ref[0] = cond.astype(cond_ref.dtype)                  # bf16 out
    x_ref[0] = x.astype(x_ref.dtype)


def embed_forward(f0, volume, units_bf16, spk_vec, noise, p):
    B, T, n_unit = units_bf16.shape
    H = p["wf0"].shape[1]
    M = p["wu"].shape[1]

    def bmap(b):
        return (b, 0, 0)

    def wspec(shape):
        nd = len(shape)
        return pl.BlockSpec(shape, lambda b: (0,) * nd)

    # TODO(synk): for long sequences tile T here (grid=(B, T//tile)).
    return pl.pallas_call(
        _embed_kernel,
        out_shape=(jax.ShapeDtypeStruct((B, T, H), jnp.bfloat16),   # cond bf16
                   jax.ShapeDtypeStruct((B, T, M), jnp.float32)),
        grid_spec=pltpu.PrefetchScalarGridSpec(
            num_scalar_prefetch=0,
            grid=(B,),
            in_specs=[
                pl.BlockSpec((1, T, 1), bmap),        # f0
                pl.BlockSpec((1, T, 1), bmap),        # volume
                pl.BlockSpec((1, T, n_unit), bmap),   # units (bf16)
                pl.BlockSpec((1, 1, H), bmap),        # gathered spk embedding
                pl.BlockSpec((1, T, M), bmap),        # noise (randn_like)
                wspec((1, H)), wspec((1, H)),         # f0_embed W^T, b
                wspec((n_unit, M)), wspec((1, M)),    # unit_embed W^T (bf16), b
                wspec((1, M)), wspec((1, M)),         # volume_embed W^T, b
            ],
            out_specs=(pl.BlockSpec((1, T, H), bmap),
                       pl.BlockSpec((1, T, M), bmap)),
        ),
        compiler_params=pltpu.CompilerParams(
            dimension_semantics=("parallel",)),
    )(f0, volume, units_bf16, spk_vec, noise,
      p["wf0"], p["bf0"], p["wu"], p["bu"], p["wv"], p["bv"])


# ----------------------------------------------------------------------------
# Kernel 2: fully fused Euler integration of the rectified-flow ODE.
# grid = (B,); Euler-step and WaveNet-layer loops run in-kernel (fori_loop);
# weights / d_all resident in VMEM for the whole call.
# ----------------------------------------------------------------------------
def _reflow_kernel(x0_ref, cond_ref, d_ref,
                   wi_ref, bi_ref,
                   wcp_ref, wcc_ref, wcn_ref, bc_ref,
                   wcd_ref, bcd_ref,
                   wo_ref, bo_ref,
                   ws_ref, bs_ref, wout_ref, bout_ref,
                   o_ref,
                   zc_sc,
                   *, n_layers, n_steps, n_chans, dt):
    C = n_chans
    L = n_layers
    T = x0_ref.shape[1]
    bf = jnp.bfloat16
    inv_sqrt2 = 1.0 / math.sqrt(2.0)
    inv_sqrtL = 1.0 / math.sqrt(L)

    cond_bf = cond_ref[0]                        # [T, H] bf16, loaded once

    # Step-invariant cond projections, cached once per batch element and
    # reused for all S Euler steps (static layer indices -> static stores).
    for l in range(L):
        zc_sc[l] = (jnp.dot(cond_bf, wcd_ref[l],
                            preferred_element_type=jnp.float32)
                    + bcd_ref[l])

    # Boundary masks for the k=3 "same"-padded conv, hoisted out of the loops.
    row = lax.broadcasted_iota(jnp.int32, (T, C), 0)
    is_first = row == 0
    is_last = row == T - 1

    def euler_step(s, x):
        # input projection (1x1 conv) + relu
        h0 = jnp.maximum(
            jnp.dot(x.astype(bf), wi_ref[...],
                    preferred_element_type=jnp.float32) + bi_ref[...], 0.0)
        skip0 = jnp.zeros((T, C), jnp.float32)

        def layer_body(l, carry):
            h, skip = carry
            d = d_ref[s * L + l]                                   # [1, C]
            y = h + d                                              # [T, C]
            # k=3, dilation=1 conv along time as three accumulating K=C
            # matmuls on sublane-shifted copies (pltpu.roll: shifts >= 0,
            # shift=+1 ~ previous frame, shift=T-1 ~ next frame, edges masked).
            y_prev = jnp.where(is_first, 0.0, pltpu.roll(y, shift=1, axis=0))
            y_next = jnp.where(is_last, 0.0,
                               pltpu.roll(y, shift=T - 1, axis=0))
            z = (jnp.dot(y_prev.astype(bf), wcp_ref[l],
                         preferred_element_type=jnp.float32)
                 + jnp.dot(y.astype(bf), wcc_ref[l],
                           preferred_element_type=jnp.float32)
                 + jnp.dot(y_next.astype(bf), wcn_ref[l],
                           preferred_element_type=jnp.float32)
                 + bc_ref[l]
                 + zc_sc[l])                                       # [T, 2C]
            # gated activation: tanh(filter) * sigmoid(gate)
            # TODO(synk): chunk order must match the real checkpoint layout.
            g = (jnp.tanh(z[:, :C]) * jax.nn.sigmoid(z[:, C:])).astype(bf)
            out = (jnp.dot(g, wo_ref[l], preferred_element_type=jnp.float32)
                   + bo_ref[l])                                    # [T, 2C]
            h_new = (h + out[:, :C]) * inv_sqrt2                   # residual
            skip_new = skip + out[:, C:]                           # skip
            return (h_new, skip_new)

        _, skip = lax.fori_loop(0, L, layer_body, (h0, skip0))

        # skip/output projections -> velocity; explicit Euler update.
        sk = jnp.maximum(
            jnp.dot((skip * inv_sqrtL).astype(bf), ws_ref[...],
                    preferred_element_type=jnp.float32) + bs_ref[...], 0.0)
        v = (jnp.dot(sk.astype(bf), wout_ref[...],
                     preferred_element_type=jnp.float32) + bout_ref[...])
        return x + dt * v

    x = lax.fori_loop(0, n_steps, euler_step, x0_ref[0])
    o_ref[0] = x.astype(o_ref.dtype)


def reflow_euler(x0, cond, d_all, p, *, infer_step, dt):
    B, T, M = x0.shape
    H = cond.shape[2]
    C = p["wn_wi"].shape[1]
    L = p["wn_wc_cur"].shape[0]
    S = infer_step

    kern = functools.partial(_reflow_kernel, n_layers=L, n_steps=S,
                             n_chans=C, dt=dt)

    def bmap(b):
        return (b, 0, 0)

    def const_spec(shape):
        nd = len(shape)
        return pl.BlockSpec(shape, lambda b: (0,) * nd)

    # TODO(synk): for realistic sizes re-derive the VMEM budget per chip
    # (v6e: ~100 MiB full-weight residency; v7x: group layers under 64 MiB).
    return pl.pallas_call(
        kern,
        out_shape=jax.ShapeDtypeStruct((B, T, M), jnp.float32),
        grid_spec=pltpu.PrefetchScalarGridSpec(
            num_scalar_prefetch=0,
            grid=(B,),
            in_specs=[
                pl.BlockSpec((1, T, M), bmap),                     # x0
                pl.BlockSpec((1, T, H), bmap),                     # cond (bf16)
                const_spec(d_all.shape),                           # d_all resident
                const_spec(p["wn_wi"].shape), const_spec(p["wn_bi"].shape),
                const_spec(p["wn_wc_prev"].shape),
                const_spec(p["wn_wc_cur"].shape),
                const_spec(p["wn_wc_next"].shape),
                const_spec(p["wn_bc"].shape),
                const_spec(p["wn_wcd"].shape), const_spec(p["wn_bcd"].shape),
                const_spec(p["wn_wo"].shape), const_spec(p["wn_bo"].shape),
                const_spec(p["wn_ws"].shape), const_spec(p["wn_bs"].shape),
                const_spec(p["wn_wout"].shape), const_spec(p["wn_bout"].shape),
            ],
            out_specs=pl.BlockSpec((1, T, M), bmap),
            scratch_shapes=[pltpu.VMEM((L, T, 2 * C), jnp.float32)],  # z_cond
        ),
        compiler_params=pltpu.CompilerParams(
            dimension_semantics=("parallel",),
            vmem_limit_bytes=64 << 20),
    )(x0, cond, d_all,
      p["wn_wi"], p["wn_bi"],
      p["wn_wc_prev"], p["wn_wc_cur"], p["wn_wc_next"], p["wn_bc"],
      p["wn_wcd"], p["wn_bcd"], p["wn_wo"], p["wn_bo"],
      p["wn_ws"], p["wn_bs"], p["wn_wout"], p["wn_bout"])


# ----------------------------------------------------------------------------
# Glue: parameters, sinusoidal diffusion-step embedding, full forward.
# ----------------------------------------------------------------------------
def init_params(key, *, n_unit, n_spk, n_hidden, out_dims, n_layers, n_chans):
    ks = iter(jax.random.split(key, 40))
    H, M, C, L = n_hidden, out_dims, n_chans, n_layers
    bfd = jnp.bfloat16

    def nrm(shape, scale=0.1, dtype=jnp.float32):
        v = scale * jax.random.normal(next(ks), shape, dtype=jnp.float32)
        return v.astype(dtype)

    return dict(
        # Unit2Wav_VAE embeddings (Linear weights stored transposed)
        wf0=nrm((1, H)), bf0=nrm((1, H)),
        wu=nrm((n_unit, M), dtype=bfd), bu=nrm((1, M)),
        wv=nrm((1, M)), bv=nrm((1, M)),
        spk_table=nrm((n_spk, H)),
        # diffusion-step embedding MLP (host-side glue, f32)
        mlp_w1=nrm((C, 4 * C)), mlp_b1=nrm((1, 4 * C)),
        mlp_w2=nrm((4 * C, C)), mlp_b2=nrm((1, C)),
        # WaveNet backbone (matmul weights bf16, biases f32; synthetic init).
        # The k=3 conv weight is stored pre-split into prev/cur/next taps so
        # the kernel runs three full-width K=C matmuls (no [T,3C] concat).
        wn_wi=nrm((M, C), dtype=bfd), wn_bi=nrm((1, C)),
        wn_wd=nrm((L, C, C)), wn_bd=nrm((L, 1, C)),
        wn_wc_prev=nrm((L, C, 2 * C), dtype=bfd),
        wn_wc_cur=nrm((L, C, 2 * C), dtype=bfd),
        wn_wc_next=nrm((L, C, 2 * C), dtype=bfd),
        wn_bc=nrm((L, 1, 2 * C)),
        wn_wcd=nrm((L, H, 2 * C), dtype=bfd), wn_bcd=nrm((L, 1, 2 * C)),
        wn_wo=nrm((L, C, 2 * C), dtype=bfd), wn_bo=nrm((L, 1, 2 * C)),
        wn_ws=nrm((C, C), dtype=bfd), wn_bs=nrm((1, C)),
        wn_wout=nrm((C, M), dtype=bfd), wn_bout=nrm((1, M)),
    )


def _mish(x):
    return x * jnp.tanh(jax.nn.softplus(x))


def _step_embedding(t, p):
    C = p["wn_wi"].shape[1]
    half = C // 2
    scale = math.log(10000.0) / (half - 1)
    freqs = jnp.exp(-scale * jnp.arange(half, dtype=jnp.float32))
    arg = (1000.0 * t) * freqs
    emb = jnp.concatenate([jnp.sin(arg), jnp.cos(arg)], axis=-1)[None, :]
    h = _mish(emb @ p["mlp_w1"] + p["mlp_b1"])
    return h @ p["mlp_w2"] + p["mlp_b2"]                      # [1, C]


def unit2wav_vae_forward(params, units, f0, volume, spk_id, noise,
                         infer_step=4):
    """units: [B,T,n_unit], f0/volume: [B,T,1], spk_id: [B,1] int32,
    noise: [B,T,out_dims] (stands in for torch.randn_like(x)).
    Returns x: [B, T, out_dims]."""
    # speaker-embedding gather is glue; the add happens inside the kernel
    spk_vec = params["spk_table"][spk_id[:, 0]][:, None, :]   # [B, 1, H]
    cond, x = embed_forward(f0, volume, units.astype(jnp.bfloat16),
                            spk_vec, noise, params)

    # Precompute the (step, layer) diffusion-step projections (M=1 matmuls —
    # hoisted to JAX so wn_wd never enters VMEM); the whole (S*L, 1, C) block
    # is resident in the reflow kernel.
    dt = 1.0 / infer_step
    ts = jnp.arange(infer_step, dtype=jnp.float32) * dt
    step_embs = jax.vmap(lambda t: _step_embedding(t, params))(ts)  # [S,1,C]
    d_all = (jnp.einsum("sic,lcd->slid", step_embs, params["wn_wd"])
             + params["wn_bd"][None])                               # [S,L,1,C]
    S, L, _, C = d_all.shape
    d_all = d_all.reshape(S * L, 1, C)

    # Bi_RectifiedFlow(infer=True, x_start=x, cond=cond, method='euler'):
    # fused Euler integration of dx/dt = WaveNet(x, 1000*t, cond), t: 0 -> 1.
    return reflow_euler(x, cond, d_all, params, infer_step=infer_step, dt=dt)


if __name__ == "__main__":
    # Small but lane-dense demo shapes (channel dims = multiples of 128).
    B, T = 2, 64
    n_unit, n_hidden, out_dims = 128, 128, 128
    n_layers, n_chans, n_spk = 3, 128, 4
    infer_step = 4

    key = jax.random.PRNGKey(0)
    kp, ku, kf, kv, kn = jax.random.split(key, 5)
    params = init_params(kp, n_unit=n_unit, n_spk=n_spk, n_hidden=n_hidden,
                         out_dims=out_dims, n_layers=n_layers,
                         n_chans=n_chans)

    units = jax.random.normal(ku, (B, T, n_unit), dtype=jnp.float32)
    f0 = 100.0 + 300.0 * jax.random.uniform(kf, (B, T, 1), dtype=jnp.float32)
    volume = jax.random.uniform(kv, (B, T, 1), dtype=jnp.float32)
    spk_id = jnp.array([[1], [3]], dtype=jnp.int32)
    noise = jax.random.normal(kn, (B, T, out_dims), dtype=jnp.float32)

    out = unit2wav_vae_forward(params, units, f0, volume, spk_id, noise,
                               infer_step=infer_step)
    out = jax.block_until_ready(out)
    assert out.shape == (B, T, out_dims)
    assert bool(jnp.all(jnp.isfinite(out)))
    print("KERNEL_OK")
</pallas_src>

<mosaic_0001>
module attributes {stable_mosaic.version = 11 : i64} {
  func.func @_embed_kernel(%arg0: i32, %arg1: memref<1x64x1xf32, #tpu.memory_space<vmem>>, %arg2: memref<1x64x1xf32, #tpu.memory_space<vmem>>, %arg3: memref<1x64x128xbf16, #tpu.memory_space<vmem>>, %arg4: memref<1x1x128xf32, #tpu.memory_space<vmem>>, %arg5: memref<1x64x128xf32, #tpu.memory_space<vmem>>, %arg6: memref<1x128xf32, #tpu.memory_space<vmem>>, %arg7: memref<1x128xf32, #tpu.memory_space<vmem>>, %arg8: memref<128x128xbf16, #tpu.memory_space<vmem>>, %arg9: memref<1x128xf32, #tpu.memory_space<vmem>>, %arg10: memref<1x128xf32, #tpu.memory_space<vmem>>, %arg11: memref<1x128xf32, #tpu.memory_space<vmem>>, %arg12: memref<1x64x128xbf16, #tpu.memory_space<vmem>>, %arg13: memref<1x64x128xf32, #tpu.memory_space<vmem>>) attributes {dimension_semantics = [#tpu.dimension_semantics<parallel>], iteration_bounds = array<i64: 2>, scalar_prefetch = 0 : i64, scratch_operands = 0 : i64, tpu.core_type = #tpu.core_type<tc>, window_params = [{transform_indices = @transform_0, window_bounds = array<i64: 1, 64, 1>}, {transform_indices = @transform_1, window_bounds = array<i64: 1, 64, 1>}, {transform_indices = @transform_2, window_bounds = array<i64: 1, 64, 128>}, {transform_indices = @transform_3, window_bounds = array<i64: 1, 1, 128>}, {transform_indices = @transform_4, window_bounds = array<i64: 1, 64, 128>}, {pipeline_mode = #tpu.pipeline_mode<synchronous>, transform_indices = @transform_5, window_bounds = array<i64: 1, 128>}, {pipeline_mode = #tpu.pipeline_mode<synchronous>, transform_indices = @transform_6, window_bounds = array<i64: 1, 128>}, {pipeline_mode = #tpu.pipeline_mode<synchronous>, transform_indices = @transform_7, window_bounds = array<i64: 128, 128>}, {pipeline_mode = #tpu.pipeline_mode<synchronous>, transform_indices = @transform_8, window_bounds = array<i64: 1, 128>}, {pipeline_mode = #tpu.pipeline_mode<synchronous>, transform_indices = @transform_9, window_bounds = array<i64: 1, 128>}, {pipeline_mode = #tpu.pipeline_mode<synchronous>, transform_indices = @transform_10, window_bounds = array<i64: 1, 128>}, {transform_indices = @transform_11, window_bounds = array<i64: 1, 64, 128>}, {transform_indices = @transform_12, window_bounds = array<i64: 1, 64, 128>}]} {
    %c0 = arith.constant 0 : index
    %c0_0 = arith.constant 0 : index
    %c0_1 = arith.constant 0 : index
    %0 = vector.load %arg1[%c0, %c0_0, %c0_1] : memref<1x64x1xf32, #tpu.memory_space<vmem>>, vector<1x64x1xf32>
    %1 = vector.shape_cast %0 : vector<1x64x1xf32> to vector<64x1xf32>
    %c0_2 = arith.constant 0 : index
    %c0_3 = arith.constant 0 : index
    %c0_4 = arith.constant 0 : index
    %2 = vector.load %arg2[%c0_2, %c0_3, %c0_4] : memref<1x64x1xf32, #tpu.memory_space<vmem>>, vector<1x64x1xf32>
    %3 = vector.shape_cast %2 : vector<1x64x1xf32> to vector<64x1xf32>
    %c0_5 = arith.constant 0 : index
    %c0_6 = arith.constant 0 : index
    %c0_7 = arith.constant 0 : index
    %4 = vector.load %arg3[%c0_5, %c0_6, %c0_7] : memref<1x64x128xbf16, #tpu.memory_space<vmem>>, vector<1x64x128xbf16>
    %5 = vector.shape_cast %4 : vector<1x64x128xbf16> to vector<64x128xbf16>
    %c0_8 = arith.constant 0 : index
    %c0_9 = arith.constant 0 : index
    %c0_10 = arith.constant 0 : index
    %6 = vector.load %arg4[%c0_8, %c0_9, %c0_10] : memref<1x1x128xf32, #tpu.memory_space<vmem>>, vector<1x1x128xf32>
    %7 = vector.shape_cast %6 : vector<1x1x128xf32> to vector<1x128xf32>
    %c0_11 = arith.constant 0 : index
    %c0_12 = arith.constant 0 : index
    %c0_13 = arith.constant 0 : index
    %8 = vector.load %arg5[%c0_11, %c0_12, %c0_13] : memref<1x64x128xf32, #tpu.memory_space<vmem>>, vector<1x64x128xf32>
    %9 = vector.shape_cast %8 : vector<1x64x128xf32> to vector<64x128xf32>
    %cst = arith.constant 7.000000e+02 : f32
    %10 = vector.broadcast %cst : f32 to vector<64x1xf32>
    %11 = arith.divf %1, %10 : vector<64x1xf32>
    %cst_14 = arith.constant 1.000000e+00 : f32
    %12 = vector.broadcast %cst_14 : f32 to vector<64x1xf32>
    %13 = arith.addf %12, %11 : vector<64x1xf32>
    %14 = math.log %13 : vector<64x1xf32>
    %c0_15 = arith.constant 0 : index
    %c0_16 = arith.constant 0 : index
    %15 = vector.load %arg6[%c0_15, %c0_16] : memref<1x128xf32, #tpu.memory_space<vmem>>, vector<1x128xf32>
    %16 = vector.broadcast %14 : vector<64x1xf32> to vector<64x128xf32>
    %17 = vector.broadcast %15 : vector<1x128xf32> to vector<64x128xf32>
    %18 = arith.mulf %16, %17 : vector<64x128xf32>
    %c0_17 = arith.constant 0 : index
    %c0_18 = arith.constant 0 : index
    %19 = vector.load %arg7[%c0_17, %c0_18] : memref<1x128xf32, #tpu.memory_space<vmem>>, vector<1x128xf32>
    %20 = vector.broadcast %19 : vector<1x128xf32> to vector<64x128xf32>
    %21 = arith.addf %18, %20 : vector<64x128xf32>
    %22 = vector.broadcast %7 : vector<1x128xf32> to vector<64x128xf32>
    %23 = arith.addf %21, %22 : vector<64x128xf32>
    %c0_19 = arith.constant 0 : index
    %c0_20 = arith.constant 0 : index
    %24 = vector.load %arg8[%c0_19, %c0_20] : memref<128x128xbf16, #tpu.memory_space<vmem>>, vector<128x128xbf16>
    %cst_21 = arith.constant dense<0.000000e+00> : vector<64x128xf32>
    %25 = tpu.matmul %5, %24, %cst_21 {dimension_numbers = #tpu.dot_dimension_numbers<[1], [0], [0], [1], [0, 0, 1, 1], [], []>} : vector<64x128xbf16>, vector<128x128xbf16>, vector<64x128xf32> -> vector<64x128xf32>
    %c0_22 = arith.constant 0 : index
    %c0_23 = arith.constant 0 : index
    %26 = vector.load %arg9[%c0_22, %c0_23] : memref<1x128xf32, #tpu.memory_space<vmem>>, vector<1x128xf32>
    %27 = vector.broadcast %26 : vector<1x128xf32> to vector<64x128xf32>
    %28 = arith.addf %25, %27 : vector<64x128xf32>
    %c0_24 = arith.constant 0 : index
    %c0_25 = arith.constant 0 : index
    %29 = vector.load %arg10[%c0_24, %c0_25] : memref<1x128xf32, #tpu.memory_space<vmem>>, vector<1x128xf32>
    %30 = vector.broadcast %3 : vector<64x1xf32> to vector<64x128xf32>
    %31 = vector.broadcast %29 : vector<1x128xf32> to vector<64x128xf32>
    %32 = arith.mulf %30, %31 : vector<64x128xf32>
    %33 = arith.addf %28, %32 : vector<64x128xf32>
    %c0_26 = arith.constant 0 : index
    %c0_27 = arith.constant 0 : index
    %34 = vector.load %arg11[%c0_26, %c0_27] : memref<1x128xf32, #tpu.memory_space<vmem>>, vector<1x128xf32>
    %35 = vector.broadcast %34 : vector<1x128xf32> to vector<64x128xf32>
    %36 = arith.addf %33, %35 : vector<64x128xf32>
    %37 = arith.addf %36, %9 : vector<64x128xf32>
    %38 = arith.truncf %23 : vector<64x128xf32> to vector<64x128xbf16>
    %c0_28 = arith.constant 0 : index
    %c0_29 = arith.constant 0 : index
    %c0_30 = arith.constant 0 : index
    %39 = vector.load %arg12[%c0_28, %c0_29, %c0_30] : memref<1x64x128xbf16, #tpu.memory_space<vmem>>, vector<1x64x128xbf16>
    %40 = vector.shape_cast %39 : vector<1x64x128xbf16> to vector<64x128xbf16>
    %41 = vector.shape_cast %38 : vector<64x128xbf16> to vector<1x64x128xbf16>
    tpu.vector_store %arg12[%c0_28, %c0_29, %c0_30], %41 {strides = array<i32>} : memref<1x64x128xbf16, #tpu.memory_space<vmem>>, vector<1x64x128xbf16>,
    %c0_31 = arith.constant 0 : index
    %c0_32 = arith.constant 0 : index
    %c0_33 = arith.constant 0 : index
    %42 = vector.load %arg13[%c0_31, %c0_32, %c0_33] : memref<1x64x128xf32, #tpu.memory_space<vmem>>, vector<1x64x128xf32>
    %43 = vector.shape_cast %42 : vector<1x64x128xf32> to vector<64x128xf32>
    %44 = vector.shape_cast %37 : vector<64x128xf32> to vector<1x64x128xf32>
    tpu.vector_store %arg13[%c0_31, %c0_32, %c0_33], %44 {strides = array<i32>} : memref<1x64x128xf32, #tpu.memory_space<vmem>>, vector<1x64x128xf32>,
    return
  }
  func.func @transform_0(%arg0: i32) -> (i32, i32, i32) {
    %c0_i32 = arith.constant 0 : i32
    %c0_i32_0 = arith.constant 0 : i32
    %c0_i32_1 = arith.constant 0 : i32
    return %arg0, %c0_i32, %c0_i32_0 : i32, i32, i32
  }
  func.func @transform_1(%arg0: i32) -> (i32, i32, i32) {
    %c0_i32 = arith.constant 0 : i32
    %c0_i32_0 = arith.constant 0 : i32
    %c0_i32_1 = arith.constant 0 : i32
    return %arg0, %c0_i32, %c0_i32_0 : i32, i32, i32
  }
  func.func @transform_2(%arg0: i32) -> (i32, i32, i32) {
    %c0_i32 = arith.constant 0 : i32
    %c0_i32_0 = arith.constant 0 : i32
    %c0_i32_1 = arith.constant 0 : i32
    return %arg0, %c0_i32, %c0_i32_0 : i32, i32, i32
  }
  func.func @transform_3(%arg0: i32) -> (i32, i32, i32) {
    %c0_i32 = arith.constant 0 : i32
    %c0_i32_0 = arith.constant 0 : i32
    %c0_i32_1 = arith.constant 0 : i32
    return %arg0, %c0_i32, %c0_i32_0 : i32, i32, i32
  }
  func.func @transform_4(%arg0: i32) -> (i32, i32, i32) {
    %c0_i32 = arith.constant 0 : i32
    %c0_i32_0 = arith.constant 0 : i32
    %c0_i32_1 = arith.constant 0 : i32
    return %arg0, %c0_i32, %c0_i32_0 : i32, i32, i32
  }
  func.func @transform_5(%arg0: i32) -> (i32, i32) {
    %c0_i32 = arith.constant 0 : i32
    %c0_i32_0 = arith.constant 0 : i32
    %c0_i32_1 = arith.constant 0 : i32
    return %c0_i32, %c0_i32_0 : i32, i32
  }
  func.func @transform_6(%arg0: i32) -> (i32, i32) {
    %c0_i32 = arith.constant 0 : i32
    %c0_i32_0 = arith.constant 0 : i32
    %c0_i32_1 = arith.constant 0 : i32
    return %c0_i32, %c0_i32_0 : i32, i32
  }
  func.func @transform_7(%arg0: i32) -> (i32, i32) {
    %c0_i32 = arith.constant 0 : i32
    %c0_i32_0 = arith.constant 0 : i32
    %c0_i32_1 = arith.constant 0 : i32
    return %c0_i32, %c0_i32_0 : i32, i32
  }
  func.func @transform_8(%arg0: i32) -> (i32, i32) {
    %c0_i32 = arith.constant 0 : i32
    %c0_i32_0 = arith.constant 0 : i32
    %c0_i32_1 = arith.constant 0 : i32
    return %c0_i32, %c0_i32_0 : i32, i32
  }
  func.func @transform_9(%arg0: i32) -> (i32, i32) {
    %c0_i32 = arith.constant 0 : i32
    %c0_i32_0 = arith.constant 0 : i32
    %c0_i32_1 = arith.constant 0 : i32
    return %c0_i32, %c0_i32_0 : i32, i32
  }
  func.func @transform_10(%arg0: i32) -> (i32, i32) {
    %c0_i32 = arith.constant 0 : i32
    %c0_i32_0 = arith.constant 0 : i32
    %c0_i32_1 = arith.constant 0 : i32
    return %c0_i32, %c0_i32_0 : i32, i32
  }
  func.func @transform_11(%arg0: i32) -> (i32, i32, i32) {
    %c0_i32 = arith.constant 0 : i32
    %c0_i32_0 = arith.constant 0 : i32
    %c0_i32_1 = arith.constant 0 : i32
    return %arg0, %c0_i32, %c0_i32_0 : i32, i32, i32
  }
  func.func @transform_12(%arg0: i32) -> (i32, i32, i32) {
    %c0_i32 = arith.constant 0 : i32
    %c0_i32_0 = arith.constant 0 : i32
    %c0_i32_1 = arith.constant 0 : i32
    return %arg0, %c0_i32, %c0_i32_0 : i32, i32, i32
  }
}

</mosaic_0001>

<llo_original>
// kernel: tpu_custom_call.1
$region0: #{tpu_custom_call.1}
  #allocation0 [shape = 'u32[]', space=smem, size = 0x4, offset = 0x4, fixed_abs, tag = 'smem constant byte address 0x4 - core index']
  #allocation1 [shape = 'u32[144,128]{1,0:T(1,128)}', space=vmem, size = 0x12000, scoped, tag = 'internal scratch']
  %s0 = inlined_call_operand.vmem [shape: f32[2,64,1], index: 0, kind: input, shape index: {}]
  %s1 = inlined_call_operand.vmem [shape: f32[2,64,1], index: 1, kind: input, shape index: {}]
  %s2 = inlined_call_operand.vmem [shape: bf16[2,64,128], index: 2, kind: input, shape index: {}]
  %s3 = inlined_call_operand.vmem [shape: f32[2,1,128], index: 3, kind: input, shape index: {}]
  %s4 = inlined_call_operand.vmem [shape: f32[2,64,128], index: 4, kind: input, shape index: {}]
  %s5 = inlined_call_operand.vmem [shape: f32[1,128], index: 5, kind: input, shape index: {}]
  %s6 = inlined_call_operand.vmem [shape: f32[1,128], index: 6, kind: input, shape index: {}]
  %s7 = inlined_call_operand.vmem [shape: bf16[128,128], index: 7, kind: input, shape index: {}]
  %s8 = inlined_call_operand.vmem [shape: f32[1,128], index: 8, kind: input, shape index: {}]
  %s9 = inlined_call_operand.vmem [shape: f32[1,128], index: 9, kind: input, shape index: {}]
  %s10 = inlined_call_operand.vmem [shape: f32[1,128], index: 10, kind: input, shape index: {}]
  %s11 = inlined_call_operand.hbm [shape: bf16[2,64,128], index: 11, kind: output, shape index: {0}]
  %s12 = inlined_call_operand.hbm [shape: f32[2,64,128], index: 12, kind: output, shape index: {1}]
  %13 = xla_tuple %s11, %s12
  %s14 = sld [smem:[#allocation0]]
  $region85: #{tpu_custom_call.1} parent=0
    _
  %s16 = ssub.s32 1, %s14
  %s17 = scalar_select 0, %s16, %s14
  $region1: #{tpu_custom_call.1} parent=0
    #allocation2 [shape = 'u8[32768]{0}', space=vmem, size = 0x8000, scoped, tag = 'output window, operand 0']
    #allocation3 [shape = 's32[2]{0}', space=sflag, size = 0x8, scoped, tag = 'scoped memory for tpu_custom_call.1']
    #allocation4 [shape = 'u8[65536]{0}', space=vmem, size = 0x10000, scoped, tag = 'output window, operand 1']
    #allocation5 [shape = 's32[2]{0}', space=sflag, size = 0x8, scoped, tag = 'scoped memory for tpu_custom_call.1']
    %18 = vsyncpa [#allocation3], 0
    %s19 = scalar_lea.sflag [#allocation3], 1
    %20 = vsyncpa %s19, 0
    %21 = vsyncpa [#allocation5], 0
    %s22 = scalar_lea.sflag [#allocation5], 1
    %23 = vsyncpa %s22, 0
    loop: start=0, step=1, limit=4
    $region2: #{tpu_custom_call.1} parent=1 // loop_pre_header
      _
    $region3: #{tpu_custom_call.1} parent=1 // loop_header
      %s25 = sphi 0, %s29
      %p26 = scmp.ge.s32.totalorder %s25, 4
      %s35 = sphi 0, %s37
      %s38 = sphi 0, %s35
      %s39 = sphi 0, %s38
      %s55 = sphi 0, %s39
      %s61 = sphi 0, %s63
      %s64 = sphi 0, %s61
      %s65 = sphi 0, %s64
      %s81 = sphi 0, %s65
      %s87 = sphi 0, %s89
      %s90 = sphi 0, %s87
      %s91 = sphi 0, %s90
      %s107 = sphi 0, %s91
      %s113 = sphi 0, %s115
      %s116 = sphi 0, %s113
      %s117 = sphi 0, %s116
      %s133 = sphi 0, %s117
      %s139 = sphi 0, %s141
      %s142 = sphi 0, %s139
      %s143 = sphi 0, %s142
      %s159 = sphi 0, %s143
      %s163 = sphi 0, %s163
      %s165 = sphi 0, %s163
      %s166 = sphi 0, %s165
      %s180 = sphi 0, %s166
      %s184 = sphi 0, %s184
      %s186 = sphi 0, %s184
      %s187 = sphi 0, %s186
      %s201 = sphi 0, %s187
      %s205 = sphi 0, %s205
      %s207 = sphi 0, %s205
      %s208 = sphi 0, %s207
      %s222 = sphi 0, %s208
      %s226 = sphi 0, %s226
      %s228 = sphi 0, %s226
      %s229 = sphi 0, %s228
      %s243 = sphi 0, %s229
      %s247 = sphi 0, %s247
      %s249 = sphi 0, %s247
      %s250 = sphi 0, %s249
      %s264 = sphi 0, %s250
      %s268 = sphi 0, %s268
      %s270 = sphi 0, %s268
      %s271 = sphi 0, %s270
      %s285 = sphi 0, %s271
      %s291 = sphi 0, %s293
      %s294 = sphi 0, %s291
      %s295 = sphi 0, %s294
      %s311 = sphi 0, %s295
      %s317 = sphi 0, %s319
      %s320 = sphi 0, %s317
      %s321 = sphi 0, %s320
      %s337 = sphi 0, %s321
    $region4: #{tpu_custom_call.1} parent=1 // loop_header_branch
      %28 = sbr.rel (%p26) target = $region8
    $region5: #{tpu_custom_call.1} parent=1 // loop_body
      %s30 = ssub.s32 %s25, 1
      %s31 = ssub.s32 %s25, 2
      %s32 = sadd.s32 %s25, 1
      %s33 = ssub.s32 %s25, %s32
      %p34 = scmp.eq.s32.totalorder %s33, 0
      %s36 = sadd.s32 %s35, 1
      %s37 = scalar_select %p34, %s35, %s36
      %p40 = pneg %p34
      %p41 = scmp.eq.s32.totalorder %s25, 1
      %p42 = por %p40, %p41
      %p43 = scmp.ne.s32.totalorder %s35, %s38
      %p44 = scmp.eq.s32.totalorder %s25, 0
      %p45 = por %p43, %p44
      %p46 = scmp.ne.s32.totalorder %s35, %s38
      %p47 = scmp.eq.s32.totalorder %s30, 1
      %p48 = por %p46, %p47
      %p49 = scmp.ne.s32.totalorder %s38, %s39
      %p50 = scmp.eq.s32.totalorder %s30, 0
      %p51 = por %p49, %p50
      %p52 = scmp.ne.s32.totalorder %s38, %s39
      %p53 = scmp.eq.s32.totalorder %s31, 1
      %p54 = por %p52, %p53
      %p56 = scmp.ne.s32.totalorder %s39, %s55
      %p57 = scmp.eq.s32.totalorder %s31, 0
      %p58 = por %p56, %p57
      %s59 = ssub.s32 %s25, %s32
      %p60 = scmp.eq.s32.totalorder %s59, 0
      %s62 = sadd.s32 %s61, 1
      %s63 = scalar_select %p60, %s61, %s62
      %p66 = pneg %p60
      %p67 = scmp.eq.s32.totalorder %s25, 1
      %p68 = por %p66, %p67
      %p69 = scmp.ne.s32.totalorder %s61, %s64
      %p70 = scmp.eq.s32.totalorder %s25, 0
      %p71 = por %p69, %p70
      %p72 = scmp.ne.s32.totalorder %s61, %s64
      %p73 = scmp.eq.s32.totalorder %s30, 1
      %p74 = por %p72, %p73
      %p75 = scmp.ne.s32.totalorder %s64, %s65
      %p76 = scmp.eq.s32.totalorder %s30, 0
      %p77 = por %p75, %p76
      %p78 = scmp.ne.s32.totalorder %s64, %s65
      %p79 = scmp.eq.s32.totalorder %s31, 1
      %p80 = por %p78, %p79
      %p82 = scmp.ne.s32.totalorder %s65, %s81
      %p83 = scmp.eq.s32.totalorder %s31, 0
      %p84 = por %p82, %p83
      %s85 = ssub.s32 %s25, %s32
      %p86 = scmp.eq.s32.totalorder %s85, 0
      %s88 = sadd.s32 %s87, 1
      %s89 = scalar_select %p86, %s87, %s88
      %p92 = pneg %p86
      %p93 = scmp.eq.s32.totalorder %s25, 1
      %p94 = por %p92, %p93
      %p95 = scmp.ne.s32.totalorder %s87, %s90
      %p96 = scmp.eq.s32.totalorder %s25, 0
      %p97 = por %p95, %p96
      %p98 = scmp.ne.s32.totalorder %s87, %s90
      %p99 = scmp.eq.s32.totalorder %s30, 1
      %p100 = por %p98, %p99
      %p101 = scmp.ne.s32.totalorder %s90, %s91
      %p102 = scmp.eq.s32.totalorder %s30, 0
      %p103 = por %p101, %p102
      %p104 = scmp.ne.s32.totalorder %s90, %s91
      %p105 = scmp.eq.s32.totalorder %s31, 1
      %p106 = por %p104, %p105
      %p108 = scmp.ne.s32.totalorder %s91, %s107
      %p109 = scmp.eq.s32.totalorder %s31, 0
      %p110 = por %p108, %p109
      %s111 = ssub.s32 %s25, %s32
      %p112 = scmp.eq.s32.totalorder %s111, 0
      %s114 = sadd.s32 %s113, 1
      %s115 = scalar_select %p112, %s113, %s114
      %p118 = pneg %p112
      %p119 = scmp.eq.s32.totalorder %s25, 1
      %p120 = por %p118, %p119
      %p121 = scmp.ne.s32.totalorder %s113, %s116
      %p122 = scmp.eq.s32.totalorder %s25, 0
      %p123 = por %p121, %p122
      %p124 = scmp.ne.s32.totalorder %s113, %s116
      %p125 = scmp.eq.s32.totalorder %s30, 1
      %p126 = por %p124, %p125
      %p127 = scmp.ne.s32.totalorder %s116, %s117
      %p128 = scmp.eq.s32.totalorder %s30, 0
      %p129 = por %p127, %p128
      %p130 = scmp.ne.s32.totalorder %s116, %s117
      %p131 = scmp.eq.s32.totalorder %s31, 1
      %p132 = por %p130, %p131
      %p134 = scmp.ne.s32.totalorder %s117, %s133
      %p135 = scmp.eq.s32.totalorder %s31, 0
      %p136 = por %p134, %p135
      %s137 = ssub.s32 %s25, %s32
      %p138 = scmp.eq.s32.totalorder %s137, 0
      %s140 = sadd.s32 %s139, 1
      %s141 = scalar_select %p138, %s139, %s140
      %p144 = pneg %p138
      %p145 = scmp.eq.s32.totalorder %s25, 1
      %p146 = por %p144, %p145
      %p147 = scmp.ne.s32.totalorder %s139, %s142
      %p148 = scmp.eq.s32.totalorder %s25, 0
      %p149 = por %p147, %p148
      %p150 = scmp.ne.s32.totalorder %s139, %s142
      %p151 = scmp.eq.s32.totalorder %s30, 1
      %p152 = por %p150, %p151
      %p153 = scmp.ne.s32.totalorder %s142, %s143
      %p154 = scmp.eq.s32.totalorder %s30, 0
      %p155 = por %p153, %p154
      %p156 = scmp.ne.s32.totalorder %s142, %s143
      %p157 = scmp.eq.s32.totalorder %s31, 1
      %p158 = por %p156, %p157
      %p160 = scmp.ne.s32.totalorder %s143, %s159
      %p161 = scmp.eq.s32.totalorder %s31, 0
      %p162 = por %p160, %p161
      %s164 = sadd.s32 %s163, 1
      %p167 = scmp.eq.s32.totalorder %s25, 1
      %p168 = scmp.ne.s32.totalorder %s163, %s165
      %p169 = scmp.eq.s32.totalorder %s25, 0
      %p170 = por %p168, %p169
      %p171 = scmp.ne.s32.totalorder %s163, %s165
      %p172 = scmp.eq.s32.totalorder %s30, 1
      %p173 = por %p171, %p172
      %p174 = scmp.ne.s32.totalorder %s165, %s166
      %p175 = scmp.eq.s32.totalorder %s30, 0
      %p176 = por %p174, %p175
      %p177 = scmp.ne.s32.totalorder %s165, %s166
      %p178 = scmp.eq.s32.totalorder %s31, 1
      %p179 = por %p177, %p178
      %p181 = scmp.ne.s32.totalorder %s166, %s180
      %p182 = scmp.eq.s32.totalorder %s31, 0
      %p183 = por %p181, %p182
      %s185 = sadd.s32 %s184, 1
      %p188 = scmp.eq.s32.totalorder %s25, 1
      %p189 = scmp.ne.s32.totalorder %s184, %s186
      %p190 = scmp.eq.s32.totalorder %s25, 0
      %p191 = por %p189, %p190
      %p192 = scmp.ne.s32.totalorder %s184, %s186
      %p193 = scmp.eq.s32.totalorder %s30, 1
      %p194 = por %p192, %p193
      %p195 = scmp.ne.s32.totalorder %s186, %s187
      %p196 = scmp.eq.s32.totalorder %s30, 0
      %p197 = por %p195, %p196
      %p198 = scmp.ne.s32.totalorder %s186, %s187
      %p199 = scmp.eq.s32.totalorder %s31, 1
      %p200 = por %p198, %p199
      %p202 = scmp.ne.s32.totalorder %s187, %s201
      %p203 = scmp.eq.s32.totalorder %s31, 0
      %p204 = por %p202, %p203
      %s206 = sadd.s32 %s205, 1
      %p209 = scmp.eq.s32.totalorder %s25, 1
      %p210 = scmp.ne.s32.totalorder %s205, %s207
      %p211 = scmp.eq.s32.totalorder %s25, 0
      %p212 = por %p210, %p211
      %p213 = scmp.ne.s32.totalorder %s205, %s207
      %p214 = scmp.eq.s32.totalorder %s30, 1
      %p215 = por %p213, %p214
      %p216 = scmp.ne.s32.totalorder %s207, %s208
      %p217 = scmp.eq.s32.totalorder %s30, 0
      %p218 = por %p216, %p217
      %p219 = scmp.ne.s32.totalorder %s207, %s208
      %p220 = scmp.eq.s32.totalorder %s31, 1
      %p221 = por %p219, %p220
      %p223 = scmp.ne.s32.totalorder %s208, %s222
      %p224 = scmp.eq.s32.totalorder %s31, 0
      %p225 = por %p223, %p224
      %s227 = sadd.s32 %s226, 1
      %p230 = scmp.eq.s32.totalorder %s25, 1
      %p231 = scmp.ne.s32.totalorder %s226, %s228
      %p232 = scmp.eq.s32.totalorder %s25, 0
      %p233 = por %p231, %p232
      %p234 = scmp.ne.s32.totalorder %s226, %s228
      %p235 = scmp.eq.s32.totalorder %s30, 1
      %p236 = por %p234, %p235
      %p237 = scmp.ne.s32.totalorder %s228, %s229
      %p238 = scmp.eq.s32.totalorder %s30, 0
      %p239 = por %p237, %p238
      %p240 = scmp.ne.s32.totalorder %s228, %s229
      %p241 = scmp.eq.s32.totalorder %s31, 1
      %p242 = por %p240, %p241
      %p244 = scmp.ne.s32.totalorder %s229, %s243
      %p245 = scmp.eq.s32.totalorder %s31, 0
      %p246 = por %p244, %p245
      %s248 = sadd.s32 %s247, 1
      %p251 = scmp.eq.s32.totalorder %s25, 1
      %p252 = scmp.ne.s32.totalorder %s247, %s249
      %p253 = scmp.eq.s32.totalorder %s25, 0
      %p254 = por %p252, %p253
      %p255 = scmp.ne.s32.totalorder %s247, %s249
      %p256 = scmp.eq.s32.totalorder %s30, 1
      %p257 = por %p255, %p256
      %p258 = scmp.ne.s32.totalorder %s249, %s250
      %p259 = scmp.eq.s32.totalorder %s30, 0
      %p260 = por %p258, %p259
      %p261 = scmp.ne.s32.totalorder %s249, %s250
      %p262 = scmp.eq.s32.totalorder %s31, 1
      %p263 = por %p261, %p262
      %p265 = scmp.ne.s32.totalorder %s250, %s264
      %p266 = scmp.eq.s32.totalorder %s31, 0
      %p267 = por %p265, %p266
      %s269 = sadd.s32 %s268, 1
      %p272 = scmp.eq.s32.totalorder %s25, 1
      %p273 = scmp.ne.s32.totalorder %s268, %s270
      %p274 = scmp.eq.s32.totalorder %s25, 0
      %p275 = por %p273, %p274
      %p276 = scmp.ne.s32.totalorder %s268, %s270
      %p277 = scmp.eq.s32.totalorder %s30, 1
      %p278 = por %p276, %p277
      %p279 = scmp.ne.s32.totalorder %s270, %s271
      %p280 = scmp.eq.s32.totalorder %s30, 0
      %p281 = por %p279, %p280
      %p282 = scmp.ne.s32.totalorder %s270, %s271
      %p283 = scmp.eq.s32.totalorder %s31, 1
      %p284 = por %p282, %p283
      %p286 = scmp.ne.s32.totalorder %s271, %s285
      %p287 = scmp.eq.s32.totalorder %s31, 0
      %p288 = por %p286, %p287
      %s289 = ssub.s32 %s25, %s32
      %p290 = scmp.eq.s32.totalorder %s289, 0
      %s292 = sadd.s32 %s291, 1
      %s293 = scalar_select %p290, %s291, %s292
      %p296 = pneg %p290
      %p297 = scmp.eq.s32.totalorder %s25, 1
      %p298 = por %p296, %p297
      %p299 = scmp.ne.s32.totalorder %s291, %s294
      %p300 = scmp.eq.s32.totalorder %s25, 0
      %p301 = por %p299, %p300
      %p302 = scmp.ne.s32.totalorder %s291, %s294
      %p303 = scmp.eq.s32.totalorder %s30, 1
      %p304 = por %p302, %p303
      %p305 = scmp.ne.s32.totalorder %s294, %s295
      %p306 = scmp.eq.s32.totalorder %s30, 0
      %p307 = por %p305, %p306
      %p308 = scmp.ne.s32.totalorder %s294, %s295
      %p309 = scmp.eq.s32.totalorder %s31, 1
      %p310 = por %p308, %p309
      %p312 = scmp.ne.s32.totalorder %s295, %s311
      %p313 = scmp.eq.s32.totalorder %s31, 0
      %p314 = por %p312, %p313
      %s315 = ssub.s32 %s25, %s32
      %p316 = scmp.eq.s32.totalorder %s315, 0
      %s318 = sadd.s32 %s317, 1
      %s319 = scalar_select %p316, %s317, %s318
      %p322 = pneg %p316
      %p323 = scmp.eq.s32.totalorder %s25, 1
      %p324 = por %p322, %p323
      %p325 = scmp.ne.s32.totalorder %s317, %s320
      %p326 = scmp.eq.s32.totalorder %s25, 0
      %p327 = por %p325, %p326
      %p328 = scmp.ne.s32.totalorder %s317, %s320
      %p329 = scmp.eq.s32.totalorder %s30, 1
      %p330 = por %p328, %p329
      %p331 = scmp.ne.s32.totalorder %s320, %s321
      %p332 = scmp.eq.s32.totalorder %s30, 0
      %p333 = por %p331, %p332
      %p334 = scmp.ne.s32.totalorder %s320, %s321
      %p335 = scmp.eq.s32.totalorder %s31, 1
      %p336 = por %p334, %p335
      %p338 = scmp.ne.s32.totalorder %s321, %s337
      %p339 = scmp.eq.s32.totalorder %s31, 0
      %p340 = por %p338, %p339
      %p341 = scmp.le.s32.totalorder 1, %s25
      %p342 = scmp.lt.s32.totalorder %s25, 3
      %p343 = pnand %p341, %p342
      %p344 = pneg %p343
      // Predicated region
      $region9: #{tpu_custom_call.1} parent=5 // pred_check
        _
      $region10: #{tpu_custom_call.1} parent=5 // pred_check_branch
        %346 = sbr.rel (%p343) target = $region12
      $region11: #{tpu_custom_call.1} parent=5 // pred_region
        %s347 = ssub.s32 %s25, 1
        // Predicated region
        $region13: #{tpu_custom_call.1} parent=11 // pred_check
          %p348 = pneg %p176
        $region14: #{tpu_custom_call.1} parent=11 // pred_check_branch
          %350 = sbr.rel (%p348) target = $region16
        $region15: #{tpu_custom_call.1} parent=11 // pred_region
          _
        $region16: #{tpu_custom_call.1} parent=11 // pred_fallthru
          _
        // Predicated region
        $region17: #{tpu_custom_call.1} parent=11 // pred_check
          %p351 = pneg %p197
        $region18: #{tpu_custom_call.1} parent=11 // pred_check_branch
          %353 = sbr.rel (%p351) target = $region20
        $region19: #{tpu_custom_call.1} parent=11 // pred_region
          _
        $region20: #{tpu_custom_call.1} parent=11 // pred_fallthru
          _
        // Predicated region
        $region21: #{tpu_custom_call.1} parent=11 // pred_check
          %p354 = pneg %p218
        $region22: #{tpu_custom_call.1} parent=11 // pred_check_branch
          %356 = sbr.rel (%p354) target = $region24
        $region23: #{tpu_custom_call.1} parent=11 // pred_region
          _
        $region24: #{tpu_custom_call.1} parent=11 // pred_fallthru
          _
        // Predicated region
        $region25: #{tpu_custom_call.1} parent=11 // pred_check
          %p357 = pneg %p239
        $region26: #{tpu_custom_call.1} parent=11 // pred_check_branch
          %359 = sbr.rel (%p357) target = $region28
        $region27: #{tpu_custom_call.1} parent=11 // pred_region
          _
        $region28: #{tpu_custom_call.1} parent=11 // pred_fallthru
          _
        // Predicated region
        $region29: #{tpu_custom_call.1} parent=11 // pred_check
          %p360 = pneg %p260
        $region30: #{tpu_custom_call.1} parent=11 // pred_check_branch
          %362 = sbr.rel (%p360) target = $region32
        $region31: #{tpu_custom_call.1} parent=11 // pred_region
          _
        $region32: #{tpu_custom_call.1} parent=11 // pred_fallthru
          _
        // Predicated region
        $region33: #{tpu_custom_call.1} parent=11 // pred_check
          %p363 = pneg %p281
        $region34: #{tpu_custom_call.1} parent=11 // pred_check_branch
          %365 = sbr.rel (%p363) target = $region36
        $region35: #{tpu_custom_call.1} parent=11 // pred_region
          _
        $region36: #{tpu_custom_call.1} parent=11 // pred_fallthru
          _
      $region12: #{tpu_custom_call.1} parent=5 // pred_fallthru
        _
      %p366 = scmp.lt.s32.totalorder %s25, 2
      // Predicated region
      $region37: #{tpu_custom_call.1} parent=5 // pred_check
        %p367 = pneg %p366
      $region38: #{tpu_custom_call.1} parent=5 // pred_check_branch
        %369 = sbr.rel (%p367) target = $region40
      $region39: #{tpu_custom_call.1} parent=5 // pred_region
        // Predicated region
        $region41: #{tpu_custom_call.1} parent=39 // pred_check
          %p370 = pneg %p45
        $region42: #{tpu_custom_call.1} parent=39 // pred_check_branch
          %372 = sbr.rel (%p370) target = $region44
        $region43: #{tpu_custom_call.1} parent=39 // pred_region
          %p373 = scmp.lt.s32.totalorder %s25, 1
          %s374 = scalar_select %p373, %s25, 1
          %s375 = smul.addr %s374, 8
          %s376 = smul.addr %s375, 8
          %s377 = scalar_lea.vmem %s0, %s376
        $region44: #{tpu_custom_call.1} parent=39 // pred_fallthru
          _
        // Predicated region
        $region45: #{tpu_custom_call.1} parent=39 // pred_check
          %p378 = pneg %p71
        $region46: #{tpu_custom_call.1} parent=39 // pred_check_branch
          %380 = sbr.rel (%p378) target = $region48
        $region47: #{tpu_custom_call.1} parent=39 // pred_region
          %p381 = scmp.lt.s32.totalorder %s25, 1
          %s382 = scalar_select %p381, %s25, 1
          %s383 = smul.addr %s382, 8
          %s384 = smul.addr %s383, 8
          %s385 = scalar_lea.vmem %s1, %s384
        $region48: #{tpu_custom_call.1} parent=39 // pred_fallthru
          _
        // Predicated region
        $region49: #{tpu_custom_call.1} parent=39 // pred_check
          %p386 = pneg %p97
        $region50: #{tpu_custom_call.1} parent=39 // pred_check_branch
          %388 = sbr.rel (%p386) target = $region52
        $region51: #{tpu_custom_call.1} parent=39 // pred_region
          %p389 = scmp.lt.s32.totalorder %s25, 1
          %s390 = scalar_select %p389, %s25, 1
          %s391 = smul.addr %s390, 8
          %s392 = smul.addr %s391, 4
          %s393 = scalar_lea.vmem %s2, %s392
        $region52: #{tpu_custom_call.1} parent=39 // pred_fallthru
          _
        // Predicated region
        $region53: #{tpu_custom_call.1} parent=39 // pred_check
          %p394 = pneg %p123
        $region54: #{tpu_custom_call.1} parent=39 // pred_check_branch
          %396 = sbr.rel (%p394) target = $region56
        $region55: #{tpu_custom_call.1} parent=39 // pred_region
          %p397 = scmp.lt.s32.totalorder %s25, 1
          %s398 = scalar_select %p397, %s25, 1
          %s399 = scalar_lea.vmem %s3, %s398
        $region56: #{tpu_custom_call.1} parent=39 // pred_fallthru
          _
        // Predicated region
        $region57: #{tpu_custom_call.1} parent=39 // pred_check
          %p400 = pneg %p149
        $region58: #{tpu_custom_call.1} parent=39 // pred_check_branch
          %402 = sbr.rel (%p400) target = $region60
        $region59: #{tpu_custom_call.1} parent=39 // pred_region
          %p403 = scmp.lt.s32.totalorder %s25, 1
          %s404 = scalar_select %p403, %s25, 1
          %s405 = smul.addr %s404, 8
          %s406 = smul.addr %s405, 8
          %s407 = scalar_lea.vmem %s4, %s406
        $region60: #{tpu_custom_call.1} parent=39 // pred_fallthru
          _
      $region40: #{tpu_custom_call.1} parent=5 // pred_fallthru
        _
      %p408 = scmp.le.s32.totalorder 1, %s25
      %p409 = scmp.lt.s32.totalorder %s25, 3
      %p410 = pnand %p408, %p409
      %p411 = pneg %p410
      // Predicated region
      $region61: #{tpu_custom_call.1} parent=5 // pred_check
        _
      $region62: #{tpu_custom_call.1} parent=5 // pred_check_branch
        %413 = sbr.rel (%p410) target = $region64
      $region63: #{tpu_custom_call.1} parent=5 // pred_region
        %s414 = ssub.s32 %s25, 1
        %p415 = scmp.lt.s32.totalorder %s30, 1
        %s416 = scalar_select %p415, %s30, 1
        %s417 = smul.addr %s416, 8
        %s418 = smul.addr %s417, 8
        %s419 = scalar_lea.vmem %s0, %s418
        %p420 = pneg %p51
        %p421 = pneg %p48
        %p422 = scmp.lt.s32.totalorder %s30, 1
        %s423 = scalar_select %p422, %s30, 1
        %s424 = smul.addr %s423, 8
        %s425 = smul.addr %s424, 8
        %s426 = scalar_lea.vmem %s1, %s425
        %p427 = pneg %p77
        %p428 = pneg %p74
        %p429 = scmp.lt.s32.totalorder %s30, 1
        %s430 = scalar_select %p429, %s30, 1
        %s431 = smul.addr %s430, 8
        %s432 = smul.addr %s431, 4
        %s433 = scalar_lea.vmem %s2, %s432
        %p434 = pneg %p103
        %p435 = pneg %p100
        %p436 = scmp.lt.s32.totalorder %s30, 1
        %s437 = scalar_select %p436, %s30, 1
        %s438 = scalar_lea.vmem %s3, %s437
        %p439 = pneg %p129
        %p440 = pneg %p126
        %p441 = scmp.lt.s32.totalorder %s30, 1
        %s442 = scalar_select %p441, %s30, 1
        %s443 = smul.addr %s442, 8
        %s444 = smul.addr %s443, 8
        %s445 = scalar_lea.vmem %s4, %s444
        %p446 = pneg %p155
        %p447 = pneg %p152
        %p448 = pneg %p176
        %p449 = pneg %p173
        %p450 = pneg %p197
        %p451 = pneg %p194
        %p452 = pneg %p218
        %p453 = pneg %p215
        %p454 = pneg %p239
        %p455 = pneg %p236
        %p456 = pneg %p260
        %p457 = pneg %p257
        %p458 = pneg %p281
        %p459 = pneg %p278
        %p460 = pneg %p307
        %p461 = pneg %p304
        %s462 = sand.u32 %s294, 1
        %s463 = scalar_lea.sflag [#allocation3], %s462
        %s464 = sand.u32 %s294, 1
        %s465 = smul.addr %s464, 32
        %s466 = scalar_lea.vmem [#allocation2], %s465
        %p467 = pneg %p333
        %p468 = pneg %p330
        %s469 = sand.u32 %s320, 1
        %s470 = scalar_lea.sflag [#allocation5], %s469
        %s471 = sand.u32 %s320, 1
        %s472 = smul.addr %s471, 64
        %s473 = scalar_lea.vmem [#allocation4], %s472
        %p474 = scmp.lt.s32.totalorder %s30, 1
        %s475 = scalar_select %p474, %s30, 1
        %s476 = smul.addr %s475, 8
        %s477 = smul.addr %s476, 8
        %s478 = scalar_lea.vmem %s0, %s477
        %p479 = scmp.lt.s32.totalorder %s30, 1
        %s480 = scalar_select %p479, %s30, 1
        %s481 = smul.addr %s480, 8
        %s482 = smul.addr %s481, 8
        %s483 = scalar_lea.vmem %s1, %s482
        %p484 = scmp.lt.s32.totalorder %s30, 1
        %s485 = scalar_select %p484, %s30, 1
        %s486 = smul.addr %s485, 8
        %s487 = smul.addr %s486, 4
        %s488 = scalar_lea.vmem %s2, %s487
        %p489 = scmp.lt.s32.totalorder %s30, 1
        %s490 = scalar_select %p489, %s30, 1
        %s491 = scalar_lea.vmem %s3, %s490
        %p492 = scmp.lt.s32.totalorder %s30, 1
        %s493 = scalar_select %p492, %s30, 1
        %s494 = smul.addr %s493, 8
        %s495 = smul.addr %s494, 8
        %s496 = scalar_lea.vmem %s4, %s495
        %v498 = vld [vmem:[%s478] sm:$0xff]
        %v499 = vld [vmem:[%s478 + $0x8] sm:$0xff]
        %v500 = vld [vmem:[%s478 + $0x10] sm:$0xff]
        %v501 = vld [vmem:[%s478 + $0x18] sm:$0xff]
        %v502 = vld [vmem:[%s478 + $0x20] sm:$0xff]
        %v503 = vld [vmem:[%s478 + $0x28] sm:$0xff]
        %v504 = vld [vmem:[%s478 + $0x30] sm:$0xff]
        %v505 = vld [vmem:[%s478 + $0x38] sm:$0xff]
        %v506 = vld [vmem:[%s483] sm:$0xff]
        %v507 = vld [vmem:[%s483 + $0x8] sm:$0xff]
        %v508 = vld [vmem:[%s483 + $0x10] sm:$0xff]
        %v509 = vld [vmem:[%s483 + $0x18] sm:$0xff]
        %v510 = vld [vmem:[%s483 + $0x20] sm:$0xff]
        %v511 = vld [vmem:[%s483 + $0x28] sm:$0xff]
        %v512 = vld [vmem:[%s483 + $0x30] sm:$0xff]
        %v513 = vld [vmem:[%s483 + $0x38] sm:$0xff]
        %v514 = vld [vmem:[%s488] sm:$0xf]
        %v515 = vld [vmem:[%s488 + $0x4] sm:$0xf]
        %v516 = vld [vmem:[%s488 + $0x8] sm:$0xf]
        %v517 = vld [vmem:[%s488 + $0xc] sm:$0xf]
        %v518 = vld [vmem:[%s488 + $0x10] sm:$0xf]
        %v519 = vld [vmem:[%s488 + $0x14] sm:$0xf]
        %v520 = vld [vmem:[%s488 + $0x18] sm:$0xf]
        %v521 = vld [vmem:[%s488 + $0x1c] sm:$0xf]
        %v522 = vld [vmem:[%s491] sm:$0x1]
        %v523 = vld [vmem:[%s496] sm:$0xff]
        %v524 = vld [vmem:[%s496 + $0x8] sm:$0xff]
        %v525 = vld [vmem:[%s496 + $0x10] sm:$0xff]
        %v526 = vld [vmem:[%s496 + $0x18] sm:$0xff]
        %v527 = vld [vmem:[%s496 + $0x20] sm:$0xff]
        %v528 = vld [vmem:[%s496 + $0x28] sm:$0xff]
        %v529 = vld [vmem:[%s496 + $0x30] sm:$0xff]
        %v530 = vld [vmem:[%s496 + $0x38] sm:$0xff]
        %v531 = vrcp.pop 700.0
        %v532 = vmul.f32 %v498, %v531
        %v533 = vmul.f32 %v499, %v531
        %v534 = vmul.f32 %v500, %v531
        %v535 = vmul.f32 %v501, %v531
        %v536 = vmul.f32 %v502, %v531
        %v537 = vmul.f32 %v503, %v531
        %v538 = vmul.f32 %v504, %v531
        %v539 = vmul.f32 %v505, %v531
        %v540 = vadd.f32 %v532, 1.0
        %v541 = vadd.f32 %v533, 1.0
        %v542 = vadd.f32 %v534, 1.0
        %v543 = vadd.f32 %v535, 1.0
        %v544 = vadd.f32 %v536, 1.0
        %v545 = vadd.f32 %v537, 1.0
        %v546 = vadd.f32 %v538, 1.0
        %v547 = vadd.f32 %v539, 1.0
        %v548 = vlog2.pop %v540
        %v549 = vmul.f32 %v548, 0.6931472
        %v550 = vlog2.pop %v541
        %v551 = vmul.f32 %v550, 0.6931472
        %v552 = vlog2.pop %v542
        %v553 = vmul.f32 %v552, 0.6931472
        %v554 = vlog2.pop %v543
        %v555 = vmul.f32 %v554, 0.6931472
        %v556 = vlog2.pop %v544
        %v557 = vmul.f32 %v556, 0.6931472
        %v558 = vlog2.pop %v545
        %v559 = vmul.f32 %v558, 0.6931472
        %v560 = vlog2.pop %v546
        %v561 = vmul.f32 %v560, 0.6931472
        %v562 = vlog2.pop %v547
        %v563 = vmul.f32 %v562, 0.6931472
        %v564 = vld [vmem:[%s5] sm:$0x1]
        %566 = vset.pattern.permute.xlu0 0
        %567 = vperm.xlu0 %566, %v549
        %v568 = vpop.permute.xlu0 %567
        %571 = vset.pattern.permute.xlu0 0
        %572 = vperm.xlu0 %571, %v551
        %v573 = vpop.permute.xlu0 %572
        %576 = vset.pattern.permute.xlu0 0
        %577 = vperm.xlu0 %576, %v553
        %v578 = vpop.permute.xlu0 %577
        %581 = vset.pattern.permute.xlu0 0
        %582 = vperm.xlu0 %581, %v555
        %v583 = vpop.permute.xlu0 %582
        %586 = vset.pattern.permute.xlu0 0
        %587 = vperm.xlu0 %586, %v557
        %v588 = vpop.permute.xlu0 %587
        %591 = vset.pattern.permute.xlu0 0
        %592 = vperm.xlu0 %591, %v559
        %v593 = vpop.permute.xlu0 %592
        %596 = vset.pattern.permute.xlu0 0
        %597 = vperm.xlu0 %596, %v561
        %v598 = vpop.permute.xlu0 %597
        %601 = vset.pattern.permute.xlu0 0
        %602 = vperm.xlu0 %601, %v563
        %v603 = vpop.permute.xlu0 %602
        %v606 = vlaneseq
        %v607 = vshrl.u32 %v606, 7
        %v608 = vsub.s32 0, %v607
        %v609 = vrot.slane %v564, %v608
        %v611 = vmul.f32 %v568, %v609
        %v612 = vmul.f32 %v573, %v609
        %v613 = vmul.f32 %v578, %v609
        %v614 = vmul.f32 %v583, %v609
        %v615 = vmul.f32 %v588, %v609
        %v616 = vmul.f32 %v593, %v609
        %v617 = vmul.f32 %v598, %v609
        %v618 = vmul.f32 %v603, %v609
        %v619 = vld [vmem:[%s6] sm:$0x1]
        %v621 = vlaneseq
        %v622 = vshrl.u32 %v621, 7
        %v623 = vsub.s32 0, %v622
        %v624 = vrot.slane %v619, %v623
        %v626 = vadd.f32 %v611, %v624
        %v627 = vadd.f32 %v612, %v624
        %v628 = vadd.f32 %v613, %v624
        %v629 = vadd.f32 %v614, %v624
        %v630 = vadd.f32 %v615, %v624
        %v631 = vadd.f32 %v616, %v624
        %v632 = vadd.f32 %v617, %v624
        %v633 = vadd.f32 %v618, %v624
        %v635 = vlaneseq
        %v636 = vshrl.u32 %v635, 7
        %v637 = vsub.s32 0, %v636
        %v638 = vrot.slane %v522, %v637
        %v640 = vadd.f32 %v626, %v638
        %v641 = vadd.f32 %v627, %v638
        %v642 = vadd.f32 %v628, %v638
        %v643 = vadd.f32 %v629, %v638
        %v644 = vadd.f32 %v630, %v638
        %v645 = vadd.f32 %v631, %v638
        %v646 = vadd.f32 %v632, %v638
        %v647 = vadd.f32 %v633, %v638
        %v648 = vld [vmem:[%s7] sm:$0xf]
        %v649 = vld [vmem:[%s7 + $0x4] sm:$0xf]
        %v650 = vld [vmem:[%s7 + $0x8] sm:$0xf]
        %v651 = vld [vmem:[%s7 + $0xc] sm:$0xf]
        %v652 = vld [vmem:[%s7 + $0x10] sm:$0xf]
        %v653 = vld [vmem:[%s7 + $0x14] sm:$0xf]
        %v654 = vld [vmem:[%s7 + $0x18] sm:$0xf]
        %v655 = vld [vmem:[%s7 + $0x1c] sm:$0xf]
        %v656 = vld [vmem:[%s7 + $0x20] sm:$0xf]
        %v657 = vld [vmem:[%s7 + $0x24] sm:$0xf]
        %v658 = vld [vmem:[%s7 + $0x28] sm:$0xf]
        %v659 = vld [vmem:[%s7 + $0x2c] sm:$0xf]
        %v660 = vld [vmem:[%s7 + $0x30] sm:$0xf]
        %v661 = vld [vmem:[%s7 + $0x34] sm:$0xf]
        %v662 = vld [vmem:[%s7 + $0x38] sm:$0xf]
        %v663 = vld [vmem:[%s7 + $0x3c] sm:$0xf]
        %v664 = vld [vmem:[%s8] sm:$0x1]
        %v666 = vlaneseq
        %v667 = vshrl.u32 %v666, 7
        %v668 = vsub.s32 0, %v667
        %v669 = vrot.slane %v664, %v668
        %v679 = vunpack.c.l.b16 %v514
        %v680 = vunpack.c.l.b16 %v515
        %v681 = vunpack.c.l.b16 %v516
        %v682 = vunpack.c.l.b16 %v517
        %v683 = vunpack.c.l.b16 %v518
        %v684 = vunpack.c.l.b16 %v519
        %v685 = vunpack.c.l.b16 %v520
        %v686 = vunpack.c.l.b16 %v521
        %v687 = vpack.c.b16 %v680, %v679
        %v688 = vpack.c.b16 %v682, %v681
        %v689 = vpack.c.b16 %v684, %v683
        %v690 = vpack.c.b16 %v686, %v685
        %v711 = vunpack.c.l.b16 %v648
        %v712 = vunpack.c.l.b16 %v649
        %v713 = vunpack.c.l.b16 %v650
        %v714 = vunpack.c.l.b16 %v651
        %v715 = vunpack.c.l.b16 %v652
        %v716 = vunpack.c.l.b16 %v653
        %v717 = vunpack.c.l.b16 %v654
        %v718 = vunpack.c.l.b16 %v655
        %v719 = vunpack.c.l.b16 %v656
        %v720 = vunpack.c.l.b16 %v657
        %v721 = vunpack.c.l.b16 %v658
        %v722 = vunpack.c.l.b16 %v659
        %v723 = vunpack.c.l.b16 %v660
        %v724 = vunpack.c.l.b16 %v661
        %v725 = vunpack.c.l.b16 %v662
        %v726 = vunpack.c.l.b16 %v663
        %v727 = vpack.c.b16 %v712, %v711
        %v728 = vpack.c.b16 %v714, %v713
        %v729 = vpack.c.b16 %v716, %v715
        %v730 = vpack.c.b16 %v718, %v717
        %v731 = vpack.c.b16 %v720, %v719
        %v732 = vpack.c.b16 %v722, %v721
        %v733 = vpack.c.b16 %v724, %v723
        %v734 = vpack.c.b16 %v726, %v725
        %743 = vmatprep.subr.bf16.mxu0 0
        %744 = vmatpush1.bf16.msra.mxu0 %v727
        %745 = vmatprep.subr.bf16.mxu0 0
        %746 = vmatpush1.bf16.msra.mxu0 %v728
        %747 = vmatprep.subr.bf16.mxu0 0
        %748 = vmatpush1.bf16.msra.mxu0 %v729
        %749 = vmatprep.subr.bf16.mxu0 0
        %750 = vmatpush1.bf16.msra.mxu0 %v730
        %751 = vmatprep.subr.bf16.mxu0 0
        %752 = vmatpush1.bf16.msra.mxu0 %v731
        %753 = vmatprep.subr.bf16.mxu0 0
        %754 = vmatpush1.bf16.msra.mxu0 %v732
        %755 = vmatprep.subr.bf16.mxu0 0
        %756 = vmatpush1.bf16.msra.mxu0 %v733
        %757 = vmatprep.subr.bf16.mxu0 0
        %758 = vmatpush1.bf16.msra.mxu0 %v734
        %759 = vmatprep.subr.bf16.mxu0 0
        %760 = vmatpush1.bf16.msra.mxu0 0
        %761 = vmatprep.subr.bf16.mxu0 0
        %762 = vmatpush1.bf16.msra.mxu0 0
        %763 = vmatprep.subr.bf16.mxu0 0
        %764 = vmatpush1.bf16.msra.mxu0 0
        %765 = vmatprep.subr.bf16.mxu0 0
        %766 = vmatpush1.bf16.msra.mxu0 0
        %767 = vmatprep.subr.bf16.mxu0 0
        %768 = vmatpush1.bf16.msra.mxu0 0
        %769 = vmatprep.subr.bf16.mxu0 0
        %770 = vmatpush1.bf16.msra.mxu0 0
        %771 = vmatprep.subr.bf16.mxu0 0
        %772 = vmatpush1.bf16.msra.mxu0 0
        %773 = vmatprep.subr.bf16.mxu0 0
        %774 = vmatpush1.bf16.msra.mxu0 0
        %775 = vmatprep.mubr.bf16.mxu0 0
        %776 = vmatmul.mubr.bf16.gmra.mrb[0].mxu0 %v687
        %v777 = vpop.f32.mrb[0].mxu0
        %v778 = vadd.f32 %v669, %v777
        %v779 = vpop.f32.mrb[0].mxu0
        %v780 = vpop.f32.mrb[0].mxu0
        %v781 = vadd.f32 %v669, %v780
        %v782 = vpop.f32.mrb[0].mxu0
        %783 = vmatprep.mubr.bf16.mxu0 0
        %784 = vmatmul.mubr.bf16.gmra.mrb[0].mxu0 %v688
        %v785 = vpop.f32.mrb[0].mxu0
        %v786 = vadd.f32 %v669, %v785
        %v787 = vpop.f32.mrb[0].mxu0
        %v788 = vpop.f32.mrb[0].mxu0
        %v789 = vadd.f32 %v669, %v788
        %v790 = vpop.f32.mrb[0].mxu0
        %791 = vmatprep.mubr.bf16.mxu0 0
        %792 = vmatmul.mubr.bf16.gmra.mrb[0].mxu0 %v689
        %v793 = vpop.f32.mrb[0].mxu0
        %v794 = vadd.f32 %v669, %v793
        %v795 = vpop.f32.mrb[0].mxu0
        %v796 = vpop.f32.mrb[0].mxu0
        %v797 = vadd.f32 %v669, %v796
        %v798 = vpop.f32.mrb[0].mxu0
        %799 = vmatprep.mubr.bf16.mxu0 0
        %800 = vmatmul.mubr.bf16.gmra.mrb[0].mxu0 %v690
        %v801 = vpop.f32.mrb[0].mxu0
        %v802 = vadd.f32 %v669, %v801
        %v803 = vpop.f32.mrb[0].mxu0
        %v804 = vpop.f32.mrb[0].mxu0
        %v805 = vadd.f32 %v669, %v804
        %v806 = vpop.f32.mrb[0].mxu0
        %807 = vdwg.mxu0
        %v808 = vld [vmem:[%s9] sm:$0x1]
        %810 = vset.pattern.permute.xlu0 0
        %811 = vperm.xlu0 %810, %v506
        %v812 = vpop.permute.xlu0 %811
        %815 = vset.pattern.permute.xlu0 0
        %816 = vperm.xlu0 %815, %v507
        %v817 = vpop.permute.xlu0 %816
        %820 = vset.pattern.permute.xlu0 0
        %821 = vperm.xlu0 %820, %v508
        %v822 = vpop.permute.xlu0 %821
        %825 = vset.pattern.permute.xlu0 0
        %826 = vperm.xlu0 %825, %v509
        %v827 = vpop.permute.xlu0 %826
        %830 = vset.pattern.permute.xlu0 0
        %831 = vperm.xlu0 %830, %v510
        %v832 = vpop.permute.xlu0 %831
        %835 = vset.pattern.permute.xlu0 0
        %836 = vperm.xlu0 %835, %v511
        %v837 = vpop.permute.xlu0 %836
        %840 = vset.pattern.permute.xlu0 0
        %841 = vperm.xlu0 %840, %v512
        %v842 = vpop.permute.xlu0 %841
        %845 = vset.pattern.permute.xlu0 0
        %846 = vperm.xlu0 %845, %v513
        %v847 = vpop.permute.xlu0 %846
        %v850 = vlaneseq
        %v851 = vshrl.u32 %v850, 7
        %v852 = vsub.s32 0, %v851
        %v853 = vrot.slane %v808, %v852
        %v855 = vmul.f32 %v812, %v853
        %v856 = vmul.f32 %v817, %v853
        %v857 = vmul.f32 %v822, %v853
        %v858 = vmul.f32 %v827, %v853
        %v859 = vmul.f32 %v832, %v853
        %v860 = vmul.f32 %v837, %v853
        %v861 = vmul.f32 %v842, %v853
        %v862 = vmul.f32 %v847, %v853
        %v863 = vadd.f32 %v778, %v855
        %v864 = vadd.f32 %v781, %v856
        %v865 = vadd.f32 %v786, %v857
        %v866 = vadd.f32 %v789, %v858
        %v867 = vadd.f32 %v794, %v859
        %v868 = vadd.f32 %v797, %v860
        %v869 = vadd.f32 %v802, %v861
        %v870 = vadd.f32 %v805, %v862
        %v871 = vld [vmem:[%s10] sm:$0x1]
        %v873 = vlaneseq
        %v874 = vshrl.u32 %v873, 7
        %v875 = vsub.s32 0, %v874
        %v876 = vrot.slane %v871, %v875
        %v878 = vadd.f32 %v863, %v876
        %v879 = vadd.f32 %v864, %v876
        %v880 = vadd.f32 %v865, %v876
        %v881 = vadd.f32 %v866, %v876
        %v882 = vadd.f32 %v867, %v876
        %v883 = vadd.f32 %v868, %v876
        %v884 = vadd.f32 %v869, %v876
        %v885 = vadd.f32 %v870, %v876
        %v886 = vadd.f32 %v878, %v523
        %v887 = vadd.f32 %v879, %v524
        %v888 = vadd.f32 %v880, %v525
        %v889 = vadd.f32 %v881, %v526
        %v890 = vadd.f32 %v882, %v527
        %v891 = vadd.f32 %v883, %v528
        %v892 = vadd.f32 %v884, %v529
        %v893 = vadd.f32 %v885, %v530
        %v894 = vpack.c.bf16 %v641, %v640
        %v895 = vpack.c.bf16 %v643, %v642
        %v896 = vpack.c.bf16 %v645, %v644
        %v897 = vpack.c.bf16 %v647, %v646
        %v902 = vunpack.c.l.b16 %v894
        %v903 = vunpack.c.h.b16 %v894
        %v904 = vunpack.c.l.b16 %v895
        %v905 = vunpack.c.h.b16 %v895
        %v906 = vunpack.c.l.b16 %v896
        %v907 = vunpack.c.h.b16 %v896
        %v908 = vunpack.c.l.b16 %v897
        %v909 = vunpack.c.h.b16 %v897
        %v910 = vpack.c.b16 %v902, %v902
        %v911 = vpack.c.b16 %v903, %v903
        %v912 = vpack.c.b16 %v904, %v904
        %v913 = vpack.c.b16 %v905, %v905
        %v914 = vpack.c.b16 %v906, %v906
        %v915 = vpack.c.b16 %v907, %v907
        %v916 = vpack.c.b16 %v908, %v908
        %v917 = vpack.c.b16 %v909, %v909
        %926 = vst [vmem:[%s466] sm:$0xf] %v910
        %927 = vst [vmem:[%s466 + $0x4] sm:$0xf] %v911
        %928 = vst [vmem:[%s466 + $0x8] sm:$0xf] %v912
        %929 = vst [vmem:[%s466 + $0xc] sm:$0xf] %v913
        %930 = vst [vmem:[%s466 + $0x10] sm:$0xf] %v914
        %931 = vst [vmem:[%s466 + $0x14] sm:$0xf] %v915
        %932 = vst [vmem:[%s466 + $0x18] sm:$0xf] %v916
        %933 = vst [vmem:[%s466 + $0x1c] sm:$0xf] %v917
        %934 = vst [vmem:[%s473] sm:$0xff] %v886
        %935 = vst [vmem:[%s473 + $0x8] sm:$0xff] %v887
        %936 = vst [vmem:[%s473 + $0x10] sm:$0xff] %v888
        %937 = vst [vmem:[%s473 + $0x18] sm:$0xff] %v889
        %938 = vst [vmem:[%s473 + $0x20] sm:$0xff] %v890
        %939 = vst [vmem:[%s473 + $0x28] sm:$0xff] %v891
        %940 = vst [vmem:[%s473 + $0x30] sm:$0xff] %v892
        %941 = vst [vmem:[%s473 + $0x38] sm:$0xff] %v893
        %s942 = sand.u32 %s294, 1
        %s943 = scalar_lea.sflag [#allocation3], %s942
        %s944 = sand.u32 %s294, 1
        %s945 = smul.addr %s944, 32
        %s946 = scalar_lea.vmem [#allocation2], %s945
        %s947 = sand.u32 %s320, 1
        %s948 = scalar_lea.sflag [#allocation5], %s947
        %s949 = sand.u32 %s320, 1
        %s950 = smul.addr %s949, 64
        %s951 = scalar_lea.vmem [#allocation4], %s950
        // Predicated region
        $region65: #{tpu_custom_call.1} parent=63 // pred_check
          %p952 = pneg %p304
        $region66: #{tpu_custom_call.1} parent=63 // pred_check_branch
          %954 = sbr.rel (%p952) target = $region68
        $region67: #{tpu_custom_call.1} parent=63 // pred_region
          %s956 = ssub.s32 512, 512
          %957 = vsyncadd %s943, %s956
          %s958 = smul.addr %s30, 8
          %s959 = smul.addr %s958, 64
          %s960 = scalar_lea.hbm %s11, %s959
          %s961 = sshll.u32 %s946, 4
          %s962 = int_to_ptr.vmem [resolvable:$true] %s961
          %967 = dma.vmem_to_hbm [thread:$0]  %s962, 512, %s960, %s943, 64, 64, 4
        $region68: #{tpu_custom_call.1} parent=63 // pred_fallthru
          _
        // Predicated region
        $region69: #{tpu_custom_call.1} parent=63 // pred_check
          %p968 = pneg %p330
        $region70: #{tpu_custom_call.1} parent=63 // pred_check_branch
          %970 = sbr.rel (%p968) target = $region72
        $region71: #{tpu_custom_call.1} parent=63 // pred_region
          %s972 = ssub.s32 1024, 1024
          %973 = vsyncadd %s948, %s972
          %s974 = smul.addr %s30, 8
          %s975 = smul.addr %s974, 128
          %s976 = scalar_lea.hbm %s12, %s975
          %s977 = sshll.u32 %s951, 4
          %s978 = int_to_ptr.vmem [resolvable:$true] %s977
          %983 = dma.vmem_to_hbm [thread:$0]  %s978, 1024, %s976, %s948, 128, 128, 8
        $region72: #{tpu_custom_call.1} parent=63 // pred_fallthru
          _
      $region64: #{tpu_custom_call.1} parent=5 // pred_fallthru
        _
      %p984 = scmp.le.s32.totalorder 2, %s25
      // Predicated region
      $region73: #{tpu_custom_call.1} parent=5 // pred_check
        %p985 = pneg %p984
      $region74: #{tpu_custom_call.1} parent=5 // pred_check_branch
        %987 = sbr.rel (%p985) target = $region76
      $region75: #{tpu_custom_call.1} parent=5 // pred_region
        %s988 = ssub.s32 %s25, 2
        // Predicated region
        $region77: #{tpu_custom_call.1} parent=75 // pred_check
          %p989 = pneg %p310
        $region78: #{tpu_custom_call.1} parent=75 // pred_check_branch
          %991 = sbr.rel (%p989) target = $region80
        $region79: #{tpu_custom_call.1} parent=75 // pred_region
          %s992 = sand.u32 %s295, 1
          %s993 = scalar_lea.sflag [#allocation3], %s992
          %s994 = sand.u32 %s295, 1
          %s995 = smul.addr %s994, 32
          %s996 = scalar_lea.vmem [#allocation2], %s995
          %997 = dma.done %s993, 512
        $region80: #{tpu_custom_call.1} parent=75 // pred_fallthru
          _
        // Predicated region
        $region81: #{tpu_custom_call.1} parent=75 // pred_check
          %p998 = pneg %p336
        $region82: #{tpu_custom_call.1} parent=75 // pred_check_branch
          %1000 = sbr.rel (%p998) target = $region84
        $region83: #{tpu_custom_call.1} parent=75 // pred_region
          %s1001 = sand.u32 %s321, 1
          %s1002 = scalar_lea.sflag [#allocation5], %s1001
          %s1003 = sand.u32 %s321, 1
          %s1004 = smul.addr %s1003, 64
          %s1005 = scalar_lea.vmem [#allocation4], %s1004
          %1006 = dma.done %s1002, 1024
        $region84: #{tpu_custom_call.1} parent=75 // pred_fallthru
          _
      $region76: #{tpu_custom_call.1} parent=5 // pred_fallthru
        _
    $region6: #{tpu_custom_call.1} parent=1 // loop_footer
      %s29 = sadd.s32 1, %s25
    $region7: #{tpu_custom_call.1} parent=1 // loop_footer_branch
      %24 = sbr.rel target = $region3
    $region8: #{tpu_custom_call.1} parent=1 // loop_exit
      _
    %1007 = vsyncpa [#allocation3], 1
    %s1008 = scalar_lea.sflag [#allocation3], 1
    %1009 = vsyncpa %s1008, 1
    %1010 = vsyncpa [#allocation5], 1
    %s1011 = scalar_lea.sflag [#allocation5], 1
    %1012 = vsyncpa %s1011, 1

</llo_original>
